<compile_context>
chip_gen: v5e
topology: v5e:2x2
jax: 0.10.0
libtpu: 0.0.40
codegen_flags: <defaults>
</compile_context>

<pallas_src>
import functools

import jax
import jax.numpy as jnp
from jax.experimental import pallas as pl
from jax.experimental.pallas import tpu as pltpu


# ----------------------------- Pallas kernel --------------------------------

def _np_embedder_kernel(xy_ref, w0_ref, b0_ref, w1_ref, b1_ref, out_ref, *, d_in):
    tm = xy_ref.shape[0]
    h1 = w0_ref.shape[1]

    xy = xy_ref[...]                       # (tm, d_in) f32
    w0 = w0_ref[...]                       # (d_in, H1) f32

    # Layer 1 on the VPU: d_in is tiny (x_size + y_size), so an MXU matmul
    # would waste vmatmul pushes; d_in broadcast multiply-adds over (tm, H1)
    # ride the VALU/XLU slots instead (exact f32).
    h = jnp.broadcast_to(b0_ref[...], (tm, h1))
    for k in range(d_in):                  # static, fully unrolled
        h = h + xy[:, k:k + 1] * w0[k:k + 1, :]
    h = jnp.maximum(h, 0.0)                # ReLU (hidden layer only)

    # Layer 2 on the MXU; no activation after the last Linear.
    out = jnp.dot(h, w1_ref[...], preferred_element_type=jnp.float32) + b1_ref[...]
    out_ref[...] = out.astype(out_ref.dtype)


# ------------------------------ Wrapper --------------------------------------

def _round_up(v, m):
    return ((v + m - 1) // m) * m


def np_embedder_forward(x, y, params, *, max_tm=2048):
    """Pallas implementation of NPEmbedder.forward(x, y) -> r (B, N, H2)."""
    B, N, x_size = x.shape
    y_size = y.shape[-1]
    w0, b0, w1, b1 = params                # w0: (d_in, H1), w1: (H1, H2)
    d_in = x_size + y_size
    H1 = w0.shape[1]
    H2 = w1.shape[1]

    M = B * N
    # Single lane-dense (M, d_in) operand (one DMA stream, one layer-1 pass).
    xy = jnp.concatenate([x.reshape(M, x_size), y.reshape(M, y_size)], axis=-1)

    # Row tile: large to amortize per-grid-step overhead; multiple of 8.
    tm = min(max_tm, _round_up(M, 8))
    # Keep >= 2 grid steps when the row count allows it, so the "parallel"
    # axis can shard across both TensorCores on v7x.
    if M > 8 and pl.cdiv(M, tm) < 2:
        tm = _round_up(pl.cdiv(M, 2), 8)

    grid = (pl.cdiv(M, tm),)               # ragged last block -> Pallas masks it

    kernel = functools.partial(_np_embedder_kernel, d_in=d_in)
    rows = lambda d: pl.BlockSpec((tm, d), lambda i: (i, 0))
    full = lambda shape: pl.BlockSpec(shape, lambda i: (0, 0))

    out2 = pl.pallas_call(
        kernel,
        out_shape=jax.ShapeDtypeStruct((M, H2), jnp.float32),
        grid_spec=pl.GridSpec(
            grid=grid,
            in_specs=[
                rows(d_in),                 # xy rows
                full((d_in, H1)), full((1, H1)),
                full((H1, H2)), full((1, H2)),
            ],
            out_specs=rows(H2),             # lane-dense (tm, 128) output
        ),
        compiler_params=pltpu.CompilerParams(
            dimension_semantics=("parallel",),
            vmem_limit_bytes=32 * 1024 * 1024,
        ),
    )(xy, w0, b0, w1, b1)

    return out2.reshape(B, N, H2)


# -------------------------- Parameter construction ---------------------------

def _xavier_uniform(key, fan_in, fan_out):
    a = (6.0 / (fan_in + fan_out)) ** 0.5
    # Stored (in, out) so the kernel does x @ W (== PyTorch x @ W.T, W=(out,in)).
    return jax.random.uniform(key, (fan_in, fan_out), jnp.float32, -a, a)


def _linear_bias(key, fan_in, fan_out):
    # PyTorch nn.Linear default bias init: U(-1/sqrt(fan_in), 1/sqrt(fan_in)).
    bound = 1.0 / (fan_in ** 0.5)
    return jax.random.uniform(key, (1, fan_out), jnp.float32, -bound, bound)


def make_params(key, x_size, y_size, embed_layers=(64, 128)):
    layers = [x_size + y_size] + list(embed_layers)
    k = jax.random.split(key, 4)
    w0 = _xavier_uniform(k[0], layers[0], layers[1])
    b0 = _linear_bias(k[1], layers[0], layers[1])
    w1 = _xavier_uniform(k[2], layers[1], layers[2])
    b1 = _linear_bias(k[3], layers[1], layers[2])
    return (w0, b0, w1, b1)


# ----------------------------- Reference (JAX) --------------------------------

def np_embedder_reference(x, y, params):
    w0, b0, w1, b1 = params
    xy = jnp.concatenate([x, y], axis=-1)
    B, N, D = xy.shape
    h = xy.reshape(-1, D)
    h = jnp.maximum(jnp.dot(h, w0, precision=jax.lax.Precision.HIGHEST) + b0, 0.0)
    out = jnp.dot(h, w1, precision=jax.lax.Precision.HIGHEST) + b1
    return out.reshape(B, N, -1)


# --------------------------------- Main ---------------------------------------

if __name__ == "__main__":
    x_size, y_size = 4, 4
    embed_layers = (64, 128)

    key = jax.random.PRNGKey(0)
    kx, ky, kp = jax.random.split(key, 3)
    params = make_params(kp, x_size, y_size, embed_layers)

    fwd = jax.jit(functools.partial(np_embedder_forward, max_tm=2048))

    # Small, even case: B=2, N=8.
    B, N = 2, 8
    x = jax.random.normal(kx, (B, N, x_size), jnp.float32)
    y = jax.random.normal(ky, (B, N, y_size), jnp.float32)
    r = fwd(x, y, params)
    jax.block_until_ready(r)
    r_ref = np_embedder_reference(x, y, params)
    assert r.shape == (B, N, embed_layers[-1])
    assert jnp.allclose(r, r_ref, atol=1e-4, rtol=1e-4)

    # Ragged case (M not a multiple of the row tile) to exercise block masking.
    B2, N2 = 3, 37
    kx2, ky2 = jax.random.split(kx)
    x2 = jax.random.normal(kx2, (B2, N2, x_size), jnp.float32)
    y2 = jax.random.normal(ky2, (B2, N2, y_size), jnp.float32)
    r2 = fwd(x2, y2, params)
    jax.block_until_ready(r2)
    r2_ref = np_embedder_reference(x2, y2, params)
    assert r2.shape == (B2, N2, embed_layers[-1])
    assert jnp.allclose(r2, r2_ref, atol=1e-4, rtol=1e-4)

    print("KERNEL_OK")
</pallas_src>

<mosaic_0001>
module attributes {stable_mosaic.version = 11 : i64} {
  func.func @_np_embedder_kernel(%arg0: i32, %arg1: memref<8x8xf32, #tpu.memory_space<vmem>>, %arg2: memref<8x64xf32, #tpu.memory_space<vmem>>, %arg3: memref<1x64xf32, #tpu.memory_space<vmem>>, %arg4: memref<64x128xf32, #tpu.memory_space<vmem>>, %arg5: memref<1x128xf32, #tpu.memory_space<vmem>>, %arg6: memref<8x128xf32, #tpu.memory_space<vmem>>) attributes {dimension_semantics = [#tpu.dimension_semantics<parallel>], iteration_bounds = array<i64: 2>, scalar_prefetch = 0 : i64, scratch_operands = 0 : i64, tpu.core_type = #tpu.core_type<tc>, window_params = [{transform_indices = @transform_0, window_bounds = array<i64: 8, 8>}, {pipeline_mode = #tpu.pipeline_mode<synchronous>, transform_indices = @transform_1, window_bounds = array<i64: 8, 64>}, {pipeline_mode = #tpu.pipeline_mode<synchronous>, transform_indices = @transform_2, window_bounds = array<i64: 1, 64>}, {pipeline_mode = #tpu.pipeline_mode<synchronous>, transform_indices = @transform_3, window_bounds = array<i64: 64, 128>}, {pipeline_mode = #tpu.pipeline_mode<synchronous>, transform_indices = @transform_4, window_bounds = array<i64: 1, 128>}, {transform_indices = @transform_5, window_bounds = array<i64: 8, 128>}]} {
    %c0 = arith.constant 0 : index
    %c0_0 = arith.constant 0 : index
    %0 = vector.load %arg1[%c0, %c0_0] : memref<8x8xf32, #tpu.memory_space<vmem>>, vector<8x8xf32>
    %c0_1 = arith.constant 0 : index
    %c0_2 = arith.constant 0 : index
    %1 = vector.load %arg2[%c0_1, %c0_2] : memref<8x64xf32, #tpu.memory_space<vmem>>, vector<8x64xf32>
    %c0_3 = arith.constant 0 : index
    %c0_4 = arith.constant 0 : index
    %2 = vector.load %arg3[%c0_3, %c0_4] : memref<1x64xf32, #tpu.memory_space<vmem>>, vector<1x64xf32>
    %3 = vector.shape_cast %2 : vector<1x64xf32> to vector<1x64xf32>
    %4 = vector.broadcast %3 : vector<1x64xf32> to vector<8x64xf32>
    %5 = vector.extract_strided_slice %0 {offsets = [0, 0], sizes = [8, 1], strides = [1, 1]} : vector<8x8xf32> to vector<8x1xf32>
    %6 = vector.extract_strided_slice %1 {offsets = [0, 0], sizes = [1, 64], strides = [1, 1]} : vector<8x64xf32> to vector<1x64xf32>
    %7 = vector.broadcast %5 : vector<8x1xf32> to vector<8x64xf32>
    %8 = vector.broadcast %6 : vector<1x64xf32> to vector<8x64xf32>
    %9 = arith.mulf %7, %8 : vector<8x64xf32>
    %10 = arith.addf %4, %9 : vector<8x64xf32>
    %11 = vector.extract_strided_slice %0 {offsets = [0, 1], sizes = [8, 1], strides = [1, 1]} : vector<8x8xf32> to vector<8x1xf32>
    %12 = vector.extract_strided_slice %1 {offsets = [1, 0], sizes = [1, 64], strides = [1, 1]} : vector<8x64xf32> to vector<1x64xf32>
    %13 = vector.broadcast %11 : vector<8x1xf32> to vector<8x64xf32>
    %14 = vector.broadcast %12 : vector<1x64xf32> to vector<8x64xf32>
    %15 = arith.mulf %13, %14 : vector<8x64xf32>
    %16 = arith.addf %10, %15 : vector<8x64xf32>
    %17 = vector.extract_strided_slice %0 {offsets = [0, 2], sizes = [8, 1], strides = [1, 1]} : vector<8x8xf32> to vector<8x1xf32>
    %18 = vector.extract_strided_slice %1 {offsets = [2, 0], sizes = [1, 64], strides = [1, 1]} : vector<8x64xf32> to vector<1x64xf32>
    %19 = vector.broadcast %17 : vector<8x1xf32> to vector<8x64xf32>
    %20 = vector.broadcast %18 : vector<1x64xf32> to vector<8x64xf32>
    %21 = arith.mulf %19, %20 : vector<8x64xf32>
    %22 = arith.addf %16, %21 : vector<8x64xf32>
    %23 = vector.extract_strided_slice %0 {offsets = [0, 3], sizes = [8, 1], strides = [1, 1]} : vector<8x8xf32> to vector<8x1xf32>
    %24 = vector.extract_strided_slice %1 {offsets = [3, 0], sizes = [1, 64], strides = [1, 1]} : vector<8x64xf32> to vector<1x64xf32>
    %25 = vector.broadcast %23 : vector<8x1xf32> to vector<8x64xf32>
    %26 = vector.broadcast %24 : vector<1x64xf32> to vector<8x64xf32>
    %27 = arith.mulf %25, %26 : vector<8x64xf32>
    %28 = arith.addf %22, %27 : vector<8x64xf32>
    %29 = vector.extract_strided_slice %0 {offsets = [0, 4], sizes = [8, 1], strides = [1, 1]} : vector<8x8xf32> to vector<8x1xf32>
    %30 = vector.extract_strided_slice %1 {offsets = [4, 0], sizes = [1, 64], strides = [1, 1]} : vector<8x64xf32> to vector<1x64xf32>
    %31 = vector.broadcast %29 : vector<8x1xf32> to vector<8x64xf32>
    %32 = vector.broadcast %30 : vector<1x64xf32> to vector<8x64xf32>
    %33 = arith.mulf %31, %32 : vector<8x64xf32>
    %34 = arith.addf %28, %33 : vector<8x64xf32>
    %35 = vector.extract_strided_slice %0 {offsets = [0, 5], sizes = [8, 1], strides = [1, 1]} : vector<8x8xf32> to vector<8x1xf32>
    %36 = vector.extract_strided_slice %1 {offsets = [5, 0], sizes = [1, 64], strides = [1, 1]} : vector<8x64xf32> to vector<1x64xf32>
    %37 = vector.broadcast %35 : vector<8x1xf32> to vector<8x64xf32>
    %38 = vector.broadcast %36 : vector<1x64xf32> to vector<8x64xf32>
    %39 = arith.mulf %37, %38 : vector<8x64xf32>
    %40 = arith.addf %34, %39 : vector<8x64xf32>
    %41 = vector.extract_strided_slice %0 {offsets = [0, 6], sizes = [8, 1], strides = [1, 1]} : vector<8x8xf32> to vector<8x1xf32>
    %42 = vector.extract_strided_slice %1 {offsets = [6, 0], sizes = [1, 64], strides = [1, 1]} : vector<8x64xf32> to vector<1x64xf32>
    %43 = vector.broadcast %41 : vector<8x1xf32> to vector<8x64xf32>
    %44 = vector.broadcast %42 : vector<1x64xf32> to vector<8x64xf32>
    %45 = arith.mulf %43, %44 : vector<8x64xf32>
    %46 = arith.addf %40, %45 : vector<8x64xf32>
    %47 = vector.extract_strided_slice %0 {offsets = [0, 7], sizes = [8, 1], strides = [1, 1]} : vector<8x8xf32> to vector<8x1xf32>
    %48 = vector.extract_strided_slice %1 {offsets = [7, 0], sizes = [1, 64], strides = [1, 1]} : vector<8x64xf32> to vector<1x64xf32>
    %49 = vector.broadcast %47 : vector<8x1xf32> to vector<8x64xf32>
    %50 = vector.broadcast %48 : vector<1x64xf32> to vector<8x64xf32>
    %51 = arith.mulf %49, %50 : vector<8x64xf32>
    %52 = arith.addf %46, %51 : vector<8x64xf32>
    %cst = arith.constant 0.000000e+00 : f32
    %53 = vector.broadcast %cst : f32 to vector<8x64xf32>
    %54 = arith.maximumf %52, %53 : vector<8x64xf32>
    %c0_5 = arith.constant 0 : index
    %c0_6 = arith.constant 0 : index
    %55 = vector.load %arg4[%c0_5, %c0_6] : memref<64x128xf32, #tpu.memory_space<vmem>>, vector<64x128xf32>
    %cst_7 = arith.constant dense<0.000000e+00> : vector<8x128xf32>
    %56 = tpu.matmul %54, %55, %cst_7 {dimension_numbers = #tpu.dot_dimension_numbers<[1], [0], [0], [1], [0, 0, 1, 1], [], []>} : vector<8x64xf32>, vector<64x128xf32>, vector<8x128xf32> -> vector<8x128xf32>
    %c0_8 = arith.constant 0 : index
    %c0_9 = arith.constant 0 : index
    %57 = vector.load %arg5[%c0_8, %c0_9] : memref<1x128xf32, #tpu.memory_space<vmem>>, vector<1x128xf32>
    %58 = vector.broadcast %57 : vector<1x128xf32> to vector<8x128xf32>
    %59 = arith.addf %56, %58 : vector<8x128xf32>
    %c0_10 = arith.constant 0 : index
    %c0_11 = arith.constant 0 : index
    %60 = vector.load %arg6[%c0_10, %c0_11] : memref<8x128xf32, #tpu.memory_space<vmem>>, vector<8x128xf32>
    tpu.vector_store %arg6[%c0_10, %c0_11], %59 {strides = array<i32>} : memref<8x128xf32, #tpu.memory_space<vmem>>, vector<8x128xf32>,
    return
  }
  func.func @transform_0(%arg0: i32) -> (i32, i32) {
    %c0_i32 = arith.constant 0 : i32
    %c0_i32_0 = arith.constant 0 : i32
    return %arg0, %c0_i32 : i32, i32
  }
  func.func @transform_1(%arg0: i32) -> (i32, i32) {
    %c0_i32 = arith.constant 0 : i32
    %c0_i32_0 = arith.constant 0 : i32
    %c0_i32_1 = arith.constant 0 : i32
    return %c0_i32, %c0_i32_0 : i32, i32
  }
  func.func @transform_2(%arg0: i32) -> (i32, i32) {
    %c0_i32 = arith.constant 0 : i32
    %c0_i32_0 = arith.constant 0 : i32
    %c0_i32_1 = arith.constant 0 : i32
    return %c0_i32, %c0_i32_0 : i32, i32
  }
  func.func @transform_3(%arg0: i32) -> (i32, i32) {
    %c0_i32 = arith.constant 0 : i32
    %c0_i32_0 = arith.constant 0 : i32
    %c0_i32_1 = arith.constant 0 : i32
    return %c0_i32, %c0_i32_0 : i32, i32
  }
  func.func @transform_4(%arg0: i32) -> (i32, i32) {
    %c0_i32 = arith.constant 0 : i32
    %c0_i32_0 = arith.constant 0 : i32
    %c0_i32_1 = arith.constant 0 : i32
    return %c0_i32, %c0_i32_0 : i32, i32
  }
  func.func @transform_5(%arg0: i32) -> (i32, i32) {
    %c0_i32 = arith.constant 0 : i32
    %c0_i32_0 = arith.constant 0 : i32
    return %arg0, %c0_i32 : i32, i32
  }
}

</mosaic_0001>

<llo_original>
// kernel: np_embedder_forward.1
$region0: #{np_embedder_forward.1}
  #allocation0 [shape = 'u32[]', space=smem, size = 0x4, offset = 0x4, fixed_abs, tag = 'smem constant byte address 0x4 - core index']
  #allocation1 [shape = 'u32[72,128]{1,0:T(1,128)}', space=vmem, size = 0x9000, scoped, tag = 'internal scratch']
  %s0 = inlined_call_operand.vmem [shape: f32[16,8], index: 0, kind: input, shape index: {}]
  %s1 = inlined_call_operand.vmem [shape: f32[8,64], index: 1, kind: input, shape index: {}]
  %s2 = inlined_call_operand.vmem [shape: f32[1,64], index: 2, kind: input, shape index: {}]
  %s3 = inlined_call_operand.vmem [shape: f32[64,128], index: 3, kind: input, shape index: {}]
  %s4 = inlined_call_operand.vmem [shape: f32[1,128], index: 4, kind: input, shape index: {}]
  %s5 = inlined_call_operand.hbm [shape: f32[16,128], index: 5, kind: output, shape index: {}]
  %s6 = sld [smem:[#allocation0]]
  $region53: #{np_embedder_forward.1} parent=0
    _
  %s8 = ssub.s32 1, %s6
  %s9 = scalar_select 0, %s8, %s6
  $region1: #{np_embedder_forward.1} parent=0
    #allocation2 [shape = 'u8[8192]{0}', space=vmem, size = 0x2000, scoped, tag = 'output window, operand 0']
    #allocation3 [shape = 's32[2]{0}', space=sflag, size = 0x8, scoped, tag = 'scoped memory for np_embedder_forward.1']
    %10 = vsyncpa [#allocation3], 0
    %s11 = scalar_lea.sflag [#allocation3], 1
    %12 = vsyncpa %s11, 0
    loop: start=0, step=1, limit=4
    $region2: #{np_embedder_forward.1} parent=1 // loop_pre_header
      _
    $region3: #{np_embedder_forward.1} parent=1 // loop_header
      %s14 = sphi 0, %s18
      %p15 = scmp.ge.s32.totalorder %s14, 4
      %s24 = sphi 0, %s26
      %s27 = sphi 0, %s24
      %s28 = sphi 0, %s27
      %s44 = sphi 0, %s28
      %s48 = sphi 0, %s48
      %s50 = sphi 0, %s48
      %s51 = sphi 0, %s50
      %s65 = sphi 0, %s51
      %s69 = sphi 0, %s69
      %s71 = sphi 0, %s69
      %s72 = sphi 0, %s71
      %s86 = sphi 0, %s72
      %s90 = sphi 0, %s90
      %s92 = sphi 0, %s90
      %s93 = sphi 0, %s92
      %s107 = sphi 0, %s93
      %s111 = sphi 0, %s111
      %s113 = sphi 0, %s111
      %s114 = sphi 0, %s113
      %s128 = sphi 0, %s114
      %s134 = sphi 0, %s136
      %s137 = sphi 0, %s134
      %s138 = sphi 0, %s137
      %s154 = sphi 0, %s138
    $region4: #{np_embedder_forward.1} parent=1 // loop_header_branch
      %17 = sbr.rel (%p15) target = $region8
    $region5: #{np_embedder_forward.1} parent=1 // loop_body
      %s19 = ssub.s32 %s14, 1
      %s20 = ssub.s32 %s14, 2
      %s21 = sadd.s32 %s14, 1
      %s22 = ssub.s32 %s14, %s21
      %p23 = scmp.eq.s32.totalorder %s22, 0
      %s25 = sadd.s32 %s24, 1
      %s26 = scalar_select %p23, %s24, %s25
      %p29 = pneg %p23
      %p30 = scmp.eq.s32.totalorder %s14, 1
      %p31 = por %p29, %p30
      %p32 = scmp.ne.s32.totalorder %s24, %s27
      %p33 = scmp.eq.s32.totalorder %s14, 0
      %p34 = por %p32, %p33
      %p35 = scmp.ne.s32.totalorder %s24, %s27
      %p36 = scmp.eq.s32.totalorder %s19, 1
      %p37 = por %p35, %p36
      %p38 = scmp.ne.s32.totalorder %s27, %s28
      %p39 = scmp.eq.s32.totalorder %s19, 0
      %p40 = por %p38, %p39
      %p41 = scmp.ne.s32.totalorder %s27, %s28
      %p42 = scmp.eq.s32.totalorder %s20, 1
      %p43 = por %p41, %p42
      %p45 = scmp.ne.s32.totalorder %s28, %s44
      %p46 = scmp.eq.s32.totalorder %s20, 0
      %p47 = por %p45, %p46
      %s49 = sadd.s32 %s48, 1
      %p52 = scmp.eq.s32.totalorder %s14, 1
      %p53 = scmp.ne.s32.totalorder %s48, %s50
      %p54 = scmp.eq.s32.totalorder %s14, 0
      %p55 = por %p53, %p54
      %p56 = scmp.ne.s32.totalorder %s48, %s50
      %p57 = scmp.eq.s32.totalorder %s19, 1
      %p58 = por %p56, %p57
      %p59 = scmp.ne.s32.totalorder %s50, %s51
      %p60 = scmp.eq.s32.totalorder %s19, 0
      %p61 = por %p59, %p60
      %p62 = scmp.ne.s32.totalorder %s50, %s51
      %p63 = scmp.eq.s32.totalorder %s20, 1
      %p64 = por %p62, %p63
      %p66 = scmp.ne.s32.totalorder %s51, %s65
      %p67 = scmp.eq.s32.totalorder %s20, 0
      %p68 = por %p66, %p67
      %s70 = sadd.s32 %s69, 1
      %p73 = scmp.eq.s32.totalorder %s14, 1
      %p74 = scmp.ne.s32.totalorder %s69, %s71
      %p75 = scmp.eq.s32.totalorder %s14, 0
      %p76 = por %p74, %p75
      %p77 = scmp.ne.s32.totalorder %s69, %s71
      %p78 = scmp.eq.s32.totalorder %s19, 1
      %p79 = por %p77, %p78
      %p80 = scmp.ne.s32.totalorder %s71, %s72
      %p81 = scmp.eq.s32.totalorder %s19, 0
      %p82 = por %p80, %p81
      %p83 = scmp.ne.s32.totalorder %s71, %s72
      %p84 = scmp.eq.s32.totalorder %s20, 1
      %p85 = por %p83, %p84
      %p87 = scmp.ne.s32.totalorder %s72, %s86
      %p88 = scmp.eq.s32.totalorder %s20, 0
      %p89 = por %p87, %p88
      %s91 = sadd.s32 %s90, 1
      %p94 = scmp.eq.s32.totalorder %s14, 1
      %p95 = scmp.ne.s32.totalorder %s90, %s92
      %p96 = scmp.eq.s32.totalorder %s14, 0
      %p97 = por %p95, %p96
      %p98 = scmp.ne.s32.totalorder %s90, %s92
      %p99 = scmp.eq.s32.totalorder %s19, 1
      %p100 = por %p98, %p99
      %p101 = scmp.ne.s32.totalorder %s92, %s93
      %p102 = scmp.eq.s32.totalorder %s19, 0
      %p103 = por %p101, %p102
      %p104 = scmp.ne.s32.totalorder %s92, %s93
      %p105 = scmp.eq.s32.totalorder %s20, 1
      %p106 = por %p104, %p105
      %p108 = scmp.ne.s32.totalorder %s93, %s107
      %p109 = scmp.eq.s32.totalorder %s20, 0
      %p110 = por %p108, %p109
      %s112 = sadd.s32 %s111, 1
      %p115 = scmp.eq.s32.totalorder %s14, 1
      %p116 = scmp.ne.s32.totalorder %s111, %s113
      %p117 = scmp.eq.s32.totalorder %s14, 0
      %p118 = por %p116, %p117
      %p119 = scmp.ne.s32.totalorder %s111, %s113
      %p120 = scmp.eq.s32.totalorder %s19, 1
      %p121 = por %p119, %p120
      %p122 = scmp.ne.s32.totalorder %s113, %s114
      %p123 = scmp.eq.s32.totalorder %s19, 0
      %p124 = por %p122, %p123
      %p125 = scmp.ne.s32.totalorder %s113, %s114
      %p126 = scmp.eq.s32.totalorder %s20, 1
      %p127 = por %p125, %p126
      %p129 = scmp.ne.s32.totalorder %s114, %s128
      %p130 = scmp.eq.s32.totalorder %s20, 0
      %p131 = por %p129, %p130
      %s132 = ssub.s32 %s14, %s21
      %p133 = scmp.eq.s32.totalorder %s132, 0
      %s135 = sadd.s32 %s134, 1
      %s136 = scalar_select %p133, %s134, %s135
      %p139 = pneg %p133
      %p140 = scmp.eq.s32.totalorder %s14, 1
      %p141 = por %p139, %p140
      %p142 = scmp.ne.s32.totalorder %s134, %s137
      %p143 = scmp.eq.s32.totalorder %s14, 0
      %p144 = por %p142, %p143
      %p145 = scmp.ne.s32.totalorder %s134, %s137
      %p146 = scmp.eq.s32.totalorder %s19, 1
      %p147 = por %p145, %p146
      %p148 = scmp.ne.s32.totalorder %s137, %s138
      %p149 = scmp.eq.s32.totalorder %s19, 0
      %p150 = por %p148, %p149
      %p151 = scmp.ne.s32.totalorder %s137, %s138
      %p152 = scmp.eq.s32.totalorder %s20, 1
      %p153 = por %p151, %p152
      %p155 = scmp.ne.s32.totalorder %s138, %s154
      %p156 = scmp.eq.s32.totalorder %s20, 0
      %p157 = por %p155, %p156
      %p158 = scmp.le.s32.totalorder 1, %s14
      %p159 = scmp.lt.s32.totalorder %s14, 3
      %p160 = pnand %p158, %p159
      %p161 = pneg %p160
      // Predicated region
      $region9: #{np_embedder_forward.1} parent=5 // pred_check
        _
      $region10: #{np_embedder_forward.1} parent=5 // pred_check_branch
        %163 = sbr.rel (%p160) target = $region12
      $region11: #{np_embedder_forward.1} parent=5 // pred_region
        %s164 = ssub.s32 %s14, 1
        // Predicated region
        $region13: #{np_embedder_forward.1} parent=11 // pred_check
          %p165 = pneg %p61
        $region14: #{np_embedder_forward.1} parent=11 // pred_check_branch
          %167 = sbr.rel (%p165) target = $region16
        $region15: #{np_embedder_forward.1} parent=11 // pred_region
          _
        $region16: #{np_embedder_forward.1} parent=11 // pred_fallthru
          _
        // Predicated region
        $region17: #{np_embedder_forward.1} parent=11 // pred_check
          %p168 = pneg %p82
        $region18: #{np_embedder_forward.1} parent=11 // pred_check_branch
          %170 = sbr.rel (%p168) target = $region20
        $region19: #{np_embedder_forward.1} parent=11 // pred_region
          _
        $region20: #{np_embedder_forward.1} parent=11 // pred_fallthru
          _
        // Predicated region
        $region21: #{np_embedder_forward.1} parent=11 // pred_check
          %p171 = pneg %p103
        $region22: #{np_embedder_forward.1} parent=11 // pred_check_branch
          %173 = sbr.rel (%p171) target = $region24
        $region23: #{np_embedder_forward.1} parent=11 // pred_region
          _
        $region24: #{np_embedder_forward.1} parent=11 // pred_fallthru
          _
        // Predicated region
        $region25: #{np_embedder_forward.1} parent=11 // pred_check
          %p174 = pneg %p124
        $region26: #{np_embedder_forward.1} parent=11 // pred_check_branch
          %176 = sbr.rel (%p174) target = $region28
        $region27: #{np_embedder_forward.1} parent=11 // pred_region
          _
        $region28: #{np_embedder_forward.1} parent=11 // pred_fallthru
          _
      $region12: #{np_embedder_forward.1} parent=5 // pred_fallthru
        _
      %p177 = scmp.lt.s32.totalorder %s14, 2
      // Predicated region
      $region29: #{np_embedder_forward.1} parent=5 // pred_check
        %p178 = pneg %p177
      $region30: #{np_embedder_forward.1} parent=5 // pred_check_branch
        %180 = sbr.rel (%p178) target = $region32
      $region31: #{np_embedder_forward.1} parent=5 // pred_region
        // Predicated region
        $region33: #{np_embedder_forward.1} parent=31 // pred_check
          %p181 = pneg %p34
        $region34: #{np_embedder_forward.1} parent=31 // pred_check_branch
          %183 = sbr.rel (%p181) target = $region36
        $region35: #{np_embedder_forward.1} parent=31 // pred_region
          %p184 = scmp.lt.s32.totalorder %s14, 1
          %s185 = scalar_select %p184, %s14, 1
          %s186 = smul.addr %s185, 8
          %s187 = scalar_lea.vmem %s0, %s186
        $region36: #{np_embedder_forward.1} parent=31 // pred_fallthru
          _
      $region32: #{np_embedder_forward.1} parent=5 // pred_fallthru
        _
      %p188 = scmp.le.s32.totalorder 1, %s14
      %p189 = scmp.lt.s32.totalorder %s14, 3
      %p190 = pnand %p188, %p189
      %p191 = pneg %p190
      // Predicated region
      $region37: #{np_embedder_forward.1} parent=5 // pred_check
        _
      $region38: #{np_embedder_forward.1} parent=5 // pred_check_branch
        %193 = sbr.rel (%p190) target = $region40
      $region39: #{np_embedder_forward.1} parent=5 // pred_region
        %s194 = ssub.s32 %s14, 1
        %p195 = scmp.lt.s32.totalorder %s19, 1
        %s196 = scalar_select %p195, %s19, 1
        %s197 = smul.addr %s196, 8
        %s198 = scalar_lea.vmem %s0, %s197
        %p199 = pneg %p40
        %p200 = pneg %p37
        %p201 = pneg %p61
        %p202 = pneg %p58
        %p203 = pneg %p82
        %p204 = pneg %p79
        %p205 = pneg %p103
        %p206 = pneg %p100
        %p207 = pneg %p124
        %p208 = pneg %p121
        %p209 = pneg %p150
        %p210 = pneg %p147
        %s211 = sand.u32 %s137, 1
        %s212 = scalar_lea.sflag [#allocation3], %s211
        %s213 = sand.u32 %s137, 1
        %s214 = smul.addr %s213, 8
        %s215 = scalar_lea.vmem [#allocation2], %s214
        %p216 = scmp.lt.s32.totalorder %s19, 1
        %s217 = scalar_select %p216, %s19, 1
        %s218 = smul.addr %s217, 8
        %s219 = scalar_lea.vmem %s0, %s218
        %v220 = vld [vmem:[%s219] sm:$0xff]
        %v221 = vld [vmem:[%s1] sm:$0xff]
        %v222 = vld [vmem:[%s2] sm:$0x1]
        %v224 = vperm.slane %v222, 0
        %227 = vset.pattern.permute.xlu0 0
        %228 = vperm.xlu0 %227, %v220
        %v229 = vpop.permute.xlu0 %228
        %v231 = vperm.slane %v221, 0
        %v232 = vmul.f32 %v229, %v231
        %v233 = vadd.f32 %v224, %v232
        %234 = vset.pattern.permute.xlu0 1
        %235 = vperm.xlu0 %234, %v220
        %v236 = vpop.permute.xlu0 %235
        %v238 = vperm.slane %v221, 1
        %v239 = vmul.f32 %v236, %v238
        %v240 = vadd.f32 %v233, %v239
        %241 = vset.pattern.permute.xlu0 2
        %242 = vperm.xlu0 %241, %v220
        %v243 = vpop.permute.xlu0 %242
        %v245 = vperm.slane %v221, 2
        %v246 = vmul.f32 %v243, %v245
        %v247 = vadd.f32 %v240, %v246
        %248 = vset.pattern.permute.xlu0 3
        %249 = vperm.xlu0 %248, %v220
        %v250 = vpop.permute.xlu0 %249
        %v252 = vperm.slane %v221, 3
        %v253 = vmul.f32 %v250, %v252
        %v254 = vadd.f32 %v247, %v253
        %255 = vset.pattern.permute.xlu0 4
        %256 = vperm.xlu0 %255, %v220
        %v257 = vpop.permute.xlu0 %256
        %v259 = vperm.slane %v221, 4
        %v260 = vmul.f32 %v257, %v259
        %v261 = vadd.f32 %v254, %v260
        %262 = vset.pattern.permute.xlu0 5
        %263 = vperm.xlu0 %262, %v220
        %v264 = vpop.permute.xlu0 %263
        %v266 = vperm.slane %v221, 5
        %v267 = vmul.f32 %v264, %v266
        %v268 = vadd.f32 %v261, %v267
        %269 = vset.pattern.permute.xlu0 6
        %270 = vperm.xlu0 %269, %v220
        %v271 = vpop.permute.xlu0 %270
        %v273 = vperm.slane %v221, 6
        %v274 = vmul.f32 %v271, %v273
        %v275 = vadd.f32 %v268, %v274
        %276 = vset.pattern.permute.xlu0 7
        %277 = vperm.xlu0 %276, %v220
        %v278 = vpop.permute.xlu0 %277
        %v280 = vperm.slane %v221, 7
        %v281 = vmul.f32 %v278, %v280
        %v282 = vadd.f32 %v275, %v281
        %v283 = vmax.f32 %v282, 0.0
        %v284 = vld [vmem:[%s3] sm:$0xff]
        %v285 = vld [vmem:[%s3 + $0x8] sm:$0xff]
        %v286 = vld [vmem:[%s3 + $0x10] sm:$0xff]
        %v287 = vld [vmem:[%s3 + $0x18] sm:$0xff]
        %v288 = vld [vmem:[%s3 + $0x20] sm:$0xff]
        %v289 = vld [vmem:[%s3 + $0x28] sm:$0xff]
        %v290 = vld [vmem:[%s3 + $0x30] sm:$0xff]
        %v291 = vld [vmem:[%s3 + $0x38] sm:$0xff]
        %v292 = vld [vmem:[%s4] sm:$0x1]
        %v294 = vperm.slane %v292, 0
        %vm296 = vcmask 523264
        %v298 = vsel %vm296, %v283, 0
        %300 = vmatpush.msra.mxu0 0.0
        %301 = vmatpush.msra.mxu0 0.0
        %302 = vmatpush.msra.mxu0 0.0
        %303 = vmatpush.msra.mxu0 0.0
        %304 = vmatpush.msra.mxu0 0.0
        %305 = vmatpush.msra.mxu0 0.0
        %306 = vmatpush.msra.mxu0 0.0
        %307 = vmatpush.msra.mxu0 0.0
        %308 = vmatpush.msra.mxu0 %v291
        %309 = vmatpush.msra.mxu0 %v290
        %310 = vmatpush.msra.mxu0 %v289
        %311 = vmatpush.msra.mxu0 %v288
        %312 = vmatpush.msra.mxu0 %v287
        %313 = vmatpush.msra.mxu0 %v286
        %314 = vmatpush.msra.mxu0 %v285
        %315 = vmatpush.msra.mxu0 %v284
        %316 = vmatmul.f32.gmra.mxu0 %v298
        %v317 = vpop.f32.mrf.mxu0
        %v318 = vadd.f32 %v294, %v317
        %319 = vdwg.mxu0
        %320 = vst [vmem:[%s215] sm:$0xff] %v318
        %s321 = sand.u32 %s137, 1
        %s322 = scalar_lea.sflag [#allocation3], %s321
        %s323 = sand.u32 %s137, 1
        %s324 = smul.addr %s323, 8
        %s325 = scalar_lea.vmem [#allocation2], %s324
        // Predicated region
        $region41: #{np_embedder_forward.1} parent=39 // pred_check
          %p326 = pneg %p147
        $region42: #{np_embedder_forward.1} parent=39 // pred_check_branch
          %328 = sbr.rel (%p326) target = $region44
        $region43: #{np_embedder_forward.1} parent=39 // pred_region
          %330 = vsyncadd %s322, 0
          %s331 = smul.addr %s19, 8
          %s332 = scalar_lea.hbm %s5, %s331
          %s334 = sshll.u32 %s325, 4
          %s335 = int_to_ptr.vmem [resolvable:$true] %s334
          %s336 = sshll.u32 %s332, 4
          %s337 = int_to_ptr.hbm [resolvable:$true] %s336
          %339 = dma.vmem_to_hbm [thread:$0]  %s335, 128, %s337, %s322
        $region44: #{np_embedder_forward.1} parent=39 // pred_fallthru
          _
      $region40: #{np_embedder_forward.1} parent=5 // pred_fallthru
        _
      %p340 = scmp.le.s32.totalorder 2, %s14
      // Predicated region
      $region45: #{np_embedder_forward.1} parent=5 // pred_check
        %p341 = pneg %p340
      $region46: #{np_embedder_forward.1} parent=5 // pred_check_branch
        %343 = sbr.rel (%p341) target = $region48
      $region47: #{np_embedder_forward.1} parent=5 // pred_region
        %s344 = ssub.s32 %s14, 2
        // Predicated region
        $region49: #{np_embedder_forward.1} parent=47 // pred_check
          %p345 = pneg %p153
        $region50: #{np_embedder_forward.1} parent=47 // pred_check_branch
          %347 = sbr.rel (%p345) target = $region52
        $region51: #{np_embedder_forward.1} parent=47 // pred_region
          %s348 = sand.u32 %s138, 1
          %s349 = scalar_lea.sflag [#allocation3], %s348
          %s350 = sand.u32 %s138, 1
          %s351 = smul.addr %s350, 8
          %s352 = scalar_lea.vmem [#allocation2], %s351
          %354 = dma.done %s349, 128
        $region52: #{np_embedder_forward.1} parent=47 // pred_fallthru
          _
      $region48: #{np_embedder_forward.1} parent=5 // pred_fallthru
        _
    $region6: #{np_embedder_forward.1} parent=1 // loop_footer
      %s18 = sadd.s32 1, %s14
    $region7: #{np_embedder_forward.1} parent=1 // loop_footer_branch
      %13 = sbr.rel target = $region3
    $region8: #{np_embedder_forward.1} parent=1 // loop_exit
      _
    %355 = vsyncpa [#allocation3], 1
    %s356 = scalar_lea.sflag [#allocation3], 1
    %357 = vsyncpa %s356, 1

</llo_original>
